<compile_context>
chip_gen: v7x
topology: tpu7x:2x2x1
jax: 0.10.0
libtpu: 0.0.40
codegen_flags: <defaults>
</compile_context>

<pallas_src>
import functools

import jax
import jax.numpy as jnp
from jax.experimental import pallas as pl
from jax.experimental.pallas import tpu as pltpu


def _round_up(x: int, m: int) -> int:
    return ((x + m - 1) // m) * m


def _pick_tile_h(h_pad: int, tile_h: int) -> int:
    """Largest multiple of 128 that divides h_pad (itself a multiple of 128) and is <= tile_h."""
    m = h_pad // 128
    best = 1
    for d in range(1, m + 1):
        if m % d == 0 and 128 * d <= tile_h:
            best = d
    return 128 * best


def _vmem_footprint(tB: int, tH: int, n_pad: int, h_pad: int, out_bytes: int = 4) -> int:
    x_b = 2 * tB * n_pad * 2          # bf16, double-buffered
    w1_b = 2 * n_pad * tH * 2         # bf16, double-buffered
    w2_b = 2 * tH * n_pad * 2         # bf16, double-buffered
    b1_b = h_pad * 4                  # whole, un-pipelined
    b2_b = n_pad * 4                  # whole, un-pipelined
    o_b = 2 * tB * n_pad * out_bytes  # double-buffered
    acc_b = tB * n_pad * 4            # scratch
    return x_b + w1_b + w2_b + b1_b + b2_b + o_b + acc_b


def prepare_time_embedding_params(w1, b1, w2, b2):
    """One-time pad + bf16 cast of parameters (call once at load time, not per step).

    w1: (n_embd, 4n), b1: (4n,) or (1,4n), w2: (4n, n_embd), b2: (n_embd,) or (1,n_embd).
    """
    n_embd, hid = w1.shape
    n_pad = _round_up(n_embd, 128)
    h_pad = _round_up(hid, 128)

    b1 = jnp.reshape(b1, (1, hid))
    b2 = jnp.reshape(b2, (1, n_embd))

    w1_p = jnp.zeros((n_pad, h_pad), jnp.bfloat16).at[:n_embd, :hid].set(
        w1.astype(jnp.bfloat16))
    b1_p = jnp.zeros((1, h_pad), jnp.float32).at[:, :hid].set(b1.astype(jnp.float32))
    w2_p = jnp.zeros((h_pad, n_pad), jnp.bfloat16).at[:hid, :n_embd].set(
        w2.astype(jnp.bfloat16))
    b2_p = jnp.zeros((1, n_pad), jnp.float32).at[:, :n_embd].set(b2.astype(jnp.float32))

    return dict(w1=w1_p, b1=b1_p, w2=w2_p, b2=b2_p, n_embd=n_embd, hid=hid)


def time_embedding_kernel(x_ref, w1_ref, b1_ref, w2_ref, b2_ref, o_ref, acc_ref, *, tile_h):
    """One (batch-tile, hidden-tile) grid step of Linear -> SiLU -> Linear."""
    h_idx = pl.program_id(1)

    @pl.when(h_idx == 0)
    def _():
        acc_ref[...] = jnp.zeros_like(acc_ref)

    # First linear on this hidden tile: (tB, n_pad) @ (n_pad, tH) -> (tB, tH), f32 MXU acc.
    h = jnp.dot(x_ref[...], w1_ref[...], preferred_element_type=jnp.float32)

    # b1 is whole-resident in VMEM; slice the current hidden tile (lane-aligned start).
    h_start = pl.multiple_of(h_idx * tile_h, 128)
    h = h + b1_ref[:, pl.ds(h_start, tile_h)]   # (1, tH) broadcasts over sublanes
    h = h * jax.nn.sigmoid(h)                   # SiLU in f32 (VPU + EUP)

    # Second linear, accumulated over hidden tiles: (tB, tH) @ (tH, n_pad) -> (tB, n_pad).
    acc_ref[...] += jnp.dot(h.astype(jnp.bfloat16), w2_ref[...],
                            preferred_element_type=jnp.float32)

    @pl.when(h_idx == pl.num_programs(1) - 1)
    def _():
        o_ref[...] = (acc_ref[...] + b2_ref[...]).astype(o_ref.dtype)


def time_embedding(x, params, *, tile_h=1024, vmem_budget=40 * 1024 * 1024):
    """x: (B, n_embd) f32; params: output of prepare_time_embedding_params()."""
    B, n_embd = x.shape
    assert n_embd == params["n_embd"]
    n_pad = params["w1"].shape[0]
    h_pad = params["w1"].shape[1]
    out_dtype = x.dtype
    out_bytes = jnp.dtype(out_dtype).itemsize

    # Tile selection: one batch tile (weights streamed exactly once) unless the
    # x/out/acc blocks would blow VMEM; tH exactly divides h_pad (zero slack).
    tB = _round_up(B, 8)
    tH = _pick_tile_h(h_pad, tile_h)
    while _vmem_footprint(tB, tH, n_pad, h_pad, out_bytes) > vmem_budget and tH > 128:
        tH = _pick_tile_h(h_pad, tH // 2)
    while _vmem_footprint(tB, tH, n_pad, h_pad, out_bytes) > vmem_budget and tB > 8:
        tB = max(8, _round_up(tB // 2, 8))
    b_pad = _round_up(B, tB)

    # Per-call x padding + bf16 cast (cheap: x is tiny vs. weights).
    x_p = jnp.zeros((b_pad, n_pad), jnp.bfloat16).at[:B, :n_embd].set(
        x.astype(jnp.bfloat16))

    grid = (b_pad // tB, h_pad // tH)
    num_b_tiles = grid[0]

    footprint = _vmem_footprint(tB, tH, n_pad, h_pad, out_bytes)
    vmem_limit = int(min(48 * 1024 * 1024, max(footprint + 2 * 1024 * 1024,
                                               16 * 1024 * 1024)))

    flops = 2 * b_pad * n_pad * h_pad * 2  # two matmuls
    w_bytes = params["w1"].size * 2 + params["w2"].size * 2
    bytes_accessed = (x_p.size * 2 + b_pad * n_pad * out_bytes
                      + num_b_tiles * w_bytes
                      + params["b1"].size * 4 + params["b2"].size * 4)

    out_p = pl.pallas_call(
        functools.partial(time_embedding_kernel, tile_h=tH),
        out_shape=jax.ShapeDtypeStruct((b_pad, n_pad), out_dtype),
        grid_spec=pltpu.PrefetchScalarGridSpec(
            num_scalar_prefetch=0,
            grid=grid,
            in_specs=[
                pl.BlockSpec((tB, n_pad), lambda i, h: (i, 0)),     # x (resident per batch tile)
                pl.BlockSpec((n_pad, tH), lambda i, h: (0, h)),     # w1, streamed over hidden
                pl.BlockSpec(memory_space=pltpu.MemorySpace.VMEM),  # b1, whole, un-pipelined
                pl.BlockSpec((tH, n_pad), lambda i, h: (h, 0)),     # w2, streamed over hidden
                pl.BlockSpec(memory_space=pltpu.MemorySpace.VMEM),  # b2, whole, un-pipelined
            ],
            out_specs=pl.BlockSpec((tB, n_pad), lambda i, h: (i, 0)),
            scratch_shapes=[pltpu.VMEM((tB, n_pad), jnp.float32)],
        ),
        compiler_params=pltpu.CompilerParams(
            dimension_semantics=("parallel", "arbitrary"),
            vmem_limit_bytes=vmem_limit,
        ),
        cost_estimate=pl.CostEstimate(
            flops=flops,
            transcendentals=b_pad * h_pad,
            bytes_accessed=bytes_accessed,
        ),
    )(x_p, params["w1"], params["b1"], params["w2"], params["b2"])

    # NOTE: padded batch rows contain SiLU(b1) @ w2 + b2 garbage; they are
    # intentionally sliced off here — never read rows >= B of out_p.
    return out_p[:B, :n_embd]


def init_params(key, n_embd, dtype=jnp.float32):
    """Deterministic synthetic init matching nn.Linear shapes (stored transposed)."""
    k1, k2, k3, k4 = jax.random.split(key, 4)
    hid = 4 * n_embd
    lim1 = 1.0 / jnp.sqrt(n_embd)
    lim2 = 1.0 / jnp.sqrt(hid)
    w1 = jax.random.uniform(k1, (n_embd, hid), dtype, -lim1, lim1)
    b1 = jax.random.uniform(k2, (1, hid), dtype, -lim1, lim1)
    w2 = jax.random.uniform(k3, (hid, n_embd), dtype, -lim2, lim2)
    b2 = jax.random.uniform(k4, (1, n_embd), dtype, -lim2, lim2)
    return w1, b1, w2, b2


if __name__ == "__main__":
    key = jax.random.PRNGKey(0)
    kx, kp = jax.random.split(key)

    B, n_embd = 2, 32  # small shapes; hidden = 4 * n_embd = 128
    x = jax.random.normal(kx, (B, n_embd), jnp.float32)
    w1, b1, w2, b2 = init_params(kp, n_embd)

    # One-time parameter pad + bf16 cast (hoisted out of the per-call path).
    params = prepare_time_embedding_params(w1, b1, w2, b2)

    out = jax.block_until_ready(time_embedding(x, params))

    # Pure-JAX reference with the same bf16 weight / activation casts.
    w1b, w2b = w1.astype(jnp.bfloat16), w2.astype(jnp.bfloat16)
    h_ref = jnp.dot(x.astype(jnp.bfloat16), w1b,
                    preferred_element_type=jnp.float32) + b1.astype(jnp.float32)
    h_ref = h_ref * jax.nn.sigmoid(h_ref)
    ref = jnp.dot(h_ref.astype(jnp.bfloat16), w2b,
                  preferred_element_type=jnp.float32) + b2.astype(jnp.float32)

    assert out.shape == (B, n_embd)
    err = float(jnp.max(jnp.abs(out - ref)))
    assert jnp.allclose(out, ref, atol=2e-2, rtol=2e-2), err

    print("KERNEL_OK")
</pallas_src>

<mosaic_0001>
module attributes {stable_mosaic.version = 11 : i64} {
  func.func @time_embedding_kernel(%arg0: i32, %arg1: i32, %arg2: memref<8x128xbf16, #tpu.memory_space<vmem>>, %arg3: memref<128x128xbf16, #tpu.memory_space<vmem>>, %arg4: memref<1x128xf32, #tpu.memory_space<vmem>>, %arg5: memref<128x128xbf16, #tpu.memory_space<vmem>>, %arg6: memref<1x128xf32, #tpu.memory_space<vmem>>, %arg7: memref<8x128xf32, #tpu.memory_space<vmem>>, %arg8: memref<8x128xf32, #tpu.memory_space<vmem>>) attributes {dimension_semantics = [#tpu.dimension_semantics<parallel>, #tpu.dimension_semantics<arbitrary>], iteration_bounds = array<i64: 1, 1>, scalar_prefetch = 0 : i64, scratch_operands = 1 : i64, tpu.core_type = #tpu.core_type<tc>, window_params = [{transform_indices = @transform_0, window_bounds = array<i64: 8, 128>}, {transform_indices = @transform_1, window_bounds = array<i64: 128, 128>}, {pipeline_mode = #tpu.pipeline_mode<synchronous>, transform_indices = @transform_2, window_bounds = array<i64: 1, 128>}, {transform_indices = @transform_3, window_bounds = array<i64: 128, 128>}, {pipeline_mode = #tpu.pipeline_mode<synchronous>, transform_indices = @transform_4, window_bounds = array<i64: 1, 128>}, {transform_indices = @transform_5, window_bounds = array<i64: 8, 128>}]} {
    %c0_i32 = arith.constant 0 : i32
    %0 = arith.cmpi eq, %arg1, %c0_i32 : i32
    %1 = arith.extui %0 : i1 to i32
    %c0_i32_0 = arith.constant 0 : i32
    %2 = arith.cmpi ne, %1, %c0_i32_0 : i32
    scf.if %2 {
      %cst_15 = arith.constant 0.000000e+00 : f32
      %27 = vector.broadcast %cst_15 : f32 to vector<8x128xf32>
      %c0_16 = arith.constant 0 : index
      %c0_17 = arith.constant 0 : index
      %28 = vector.load %arg8[%c0_16, %c0_17] : memref<8x128xf32, #tpu.memory_space<vmem>>, vector<8x128xf32>
      tpu.vector_store %arg8[%c0_16, %c0_17], %27 {strides = array<i32>} : memref<8x128xf32, #tpu.memory_space<vmem>>, vector<8x128xf32>,
    } else {
    }
    %c0 = arith.constant 0 : index
    %c0_1 = arith.constant 0 : index
    %3 = vector.load %arg2[%c0, %c0_1] : memref<8x128xbf16, #tpu.memory_space<vmem>>, vector<8x128xbf16>
    %c0_2 = arith.constant 0 : index
    %c0_3 = arith.constant 0 : index
    %4 = vector.load %arg3[%c0_2, %c0_3] : memref<128x128xbf16, #tpu.memory_space<vmem>>, vector<128x128xbf16>
    %cst = arith.constant dense<0.000000e+00> : vector<8x128xf32>
    %5 = tpu.matmul %3, %4, %cst {dimension_numbers = #tpu.dot_dimension_numbers<[1], [0], [0], [1], [0, 0, 1, 1], [], []>} : vector<8x128xbf16>, vector<128x128xbf16>, vector<8x128xf32> -> vector<8x128xf32>
    %c128_i32 = arith.constant 128 : i32
    %6 = arith.muli %arg1, %c128_i32 : i32
    %7 = tpu.assume_multiple %6, 128 : i32
    %c0_4 = arith.constant 0 : index
    %8 = arith.index_cast %7 : i32 to index
    %9 = vector.load %arg4[%c0_4, %8] : memref<1x128xf32, #tpu.memory_space<vmem>>, vector<1x128xf32>
    %10 = vector.broadcast %9 : vector<1x128xf32> to vector<8x128xf32>
    %11 = arith.addf %5, %10 : vector<8x128xf32>
    %12 = arith.negf %11 : vector<8x128xf32>
    %13 = math.exp %12 : vector<8x128xf32>
    %cst_5 = arith.constant 1.000000e+00 : f32
    %14 = vector.broadcast %cst_5 : f32 to vector<8x128xf32>
    %15 = arith.addf %14, %13 : vector<8x128xf32>
    %16 = arith.divf %14, %15 : vector<8x128xf32>
    %17 = arith.mulf %11, %16 : vector<8x128xf32>
    %c0_6 = arith.constant 0 : index
    %c0_7 = arith.constant 0 : index
    %18 = vector.load %arg8[%c0_6, %c0_7] : memref<8x128xf32, #tpu.memory_space<vmem>>, vector<8x128xf32>
    %19 = arith.truncf %17 : vector<8x128xf32> to vector<8x128xbf16>
    %c0_8 = arith.constant 0 : index
    %c0_9 = arith.constant 0 : index
    %20 = vector.load %arg5[%c0_8, %c0_9] : memref<128x128xbf16, #tpu.memory_space<vmem>>, vector<128x128xbf16>
    %cst_10 = arith.constant dense<0.000000e+00> : vector<8x128xf32>
    %21 = tpu.matmul %19, %20, %cst_10 {dimension_numbers = #tpu.dot_dimension_numbers<[1], [0], [0], [1], [0, 0, 1, 1], [], []>} : vector<8x128xbf16>, vector<128x128xbf16>, vector<8x128xf32> -> vector<8x128xf32>
    %22 = arith.addf %18, %21 : vector<8x128xf32>
    %c0_11 = arith.constant 0 : index
    %c0_12 = arith.constant 0 : index
    %23 = vector.load %arg8[%c0_11, %c0_12] : memref<8x128xf32, #tpu.memory_space<vmem>>, vector<8x128xf32>
    tpu.vector_store %arg8[%c0_11, %c0_12], %22 {strides = array<i32>} : memref<8x128xf32, #tpu.memory_space<vmem>>, vector<8x128xf32>,
    %c0_i32_13 = arith.constant 0 : i32
    %24 = arith.cmpi eq, %arg1, %c0_i32_13 : i32
    %25 = arith.extui %24 : i1 to i32
    %c0_i32_14 = arith.constant 0 : i32
    %26 = arith.cmpi ne, %25, %c0_i32_14 : i32
    scf.if %26 {
      %c0_15 = arith.constant 0 : index
      %c0_16 = arith.constant 0 : index
      %27 = vector.load %arg8[%c0_15, %c0_16] : memref<8x128xf32, #tpu.memory_space<vmem>>, vector<8x128xf32>
      %c0_17 = arith.constant 0 : index
      %c0_18 = arith.constant 0 : index
      %28 = vector.load %arg6[%c0_17, %c0_18] : memref<1x128xf32, #tpu.memory_space<vmem>>, vector<1x128xf32>
      %29 = vector.broadcast %28 : vector<1x128xf32> to vector<8x128xf32>
      %30 = arith.addf %27, %29 : vector<8x128xf32>
      %c0_19 = arith.constant 0 : index
      %c0_20 = arith.constant 0 : index
      %31 = vector.load %arg7[%c0_19, %c0_20] : memref<8x128xf32, #tpu.memory_space<vmem>>, vector<8x128xf32>
      tpu.vector_store %arg7[%c0_19, %c0_20], %30 {strides = array<i32>} : memref<8x128xf32, #tpu.memory_space<vmem>>, vector<8x128xf32>,
    } else {
    }
    return
  }
  func.func @transform_0(%arg0: i32, %arg1: i32) -> (i32, i32) {
    %c0_i32 = arith.constant 0 : i32
    %c0_i32_0 = arith.constant 0 : i32
    return %arg0, %c0_i32 : i32, i32
  }
  func.func @transform_1(%arg0: i32, %arg1: i32) -> (i32, i32) {
    %c0_i32 = arith.constant 0 : i32
    %c0_i32_0 = arith.constant 0 : i32
    return %c0_i32, %arg1 : i32, i32
  }
  func.func @transform_2(%arg0: i32, %arg1: i32) -> (i32, i32) {
    %c0_i32 = arith.constant 0 : i32
    %c0_i32_0 = arith.constant 0 : i32
    %c0_i32_1 = arith.constant 0 : i32
    return %c0_i32, %c0_i32_0 : i32, i32
  }
  func.func @transform_3(%arg0: i32, %arg1: i32) -> (i32, i32) {
    %c0_i32 = arith.constant 0 : i32
    %c0_i32_0 = arith.constant 0 : i32
    return %arg1, %c0_i32 : i32, i32
  }
  func.func @transform_4(%arg0: i32, %arg1: i32) -> (i32, i32) {
    %c0_i32 = arith.constant 0 : i32
    %c0_i32_0 = arith.constant 0 : i32
    %c0_i32_1 = arith.constant 0 : i32
    return %c0_i32, %c0_i32_0 : i32, i32
  }
  func.func @transform_5(%arg0: i32, %arg1: i32) -> (i32, i32) {
    %c0_i32 = arith.constant 0 : i32
    %c0_i32_0 = arith.constant 0 : i32
    return %arg0, %c0_i32 : i32, i32
  }
}

</mosaic_0001>

<llo_original>
// kernel: tpu_custom_call.1
$region0: #{tpu_custom_call.1}
  #allocation0 [shape = 'u32[]', space=smem, size = 0x4, offset = 0x4, fixed_abs, tag = 'smem constant byte address 0x4 - core index']
  #allocation1 [shape = 'u32[144,128]{1,0:T(1,128)}', space=vmem, size = 0x12000, scoped, tag = 'internal scratch']
  #allocation2 [shape = 'f32[8,128]{1,0:T(8,128)}', space=vmem, size = 0x1000, scoped, tag = 'scratch operand']
  %s0 = inlined_call_operand.hbm [shape: bf16[8,128], index: 0, kind: input, shape index: {}]
  %s1 = inlined_call_operand.hbm [shape: bf16[128,128], index: 1, kind: input, shape index: {}]
  %s2 = inlined_call_operand.vmem [shape: f32[1,128], index: 2, kind: input, shape index: {}]
  %s3 = inlined_call_operand.hbm [shape: bf16[128,128], index: 3, kind: input, shape index: {}]
  %s4 = inlined_call_operand.vmem [shape: f32[1,128], index: 4, kind: input, shape index: {}]
  %s5 = inlined_call_operand.hbm [shape: f32[8,128], index: 5, kind: output, shape index: {}]
  %s6 = sld [smem:[#allocation0]]
  $region50: #{tpu_custom_call.1} parent=0
    _
  %s8 = ssub.s32 1, %s6
  %s9 = scalar_select 0, %s8, %s6
  $region1: #{tpu_custom_call.1} parent=0
    #allocation3 [shape = 'u8[2048]{0}', space=vmem, size = 0x800, scoped, tag = 'input window, operand 0, single buffered']
    #allocation4 [shape = 's32[1]{0}', space=sflag, size = 0x4, scoped, tag = 'scoped memory for tpu_custom_call.1']
    #allocation5 [shape = 's32[1]{0}', space=sflag, size = 0x4, scoped, tag = 'scoped memory for tpu_custom_call.1']
    #allocation6 [shape = 'u8[32768]{0}', space=vmem, size = 0x8000, scoped, tag = 'input window, operand 1, single buffered']
    #allocation7 [shape = 's32[1]{0}', space=sflag, size = 0x4, scoped, tag = 'scoped memory for tpu_custom_call.1']
    #allocation8 [shape = 'u8[32768]{0}', space=vmem, size = 0x8000, scoped, tag = 'input window, operand 3, single buffered']
    #allocation9 [shape = 'u8[4096]{0}', space=vmem, size = 0x1000, scoped, tag = 'output window, operand 0, single buffered']
    %10 = vsyncpa [#allocation4], 0
    %11 = vsyncpa [#allocation7], 0
    %12 = vsyncpa [#allocation5], 0
    // Predicated region
    $region2: #{tpu_custom_call.1} parent=1 // pred_check
      _
    $region3: #{tpu_custom_call.1} parent=1 // pred_check_branch
      %14 = sbr.rel (0) target = $region5
    $region4: #{tpu_custom_call.1} parent=1 // pred_region
      %s16 = ssub.s32 64, 64
      %17 = vsyncadd [#allocation4], %s16
      %s19 = sshll.u32 [#allocation3], 4
      %s20 = int_to_ptr.vmem [resolvable:$true] %s19
      %22 = dma.hbm_to_vmem [thread:$0]  %s0, 64, %s20, [#allocation4]
    $region5: #{tpu_custom_call.1} parent=1 // pred_fallthru
      _
    // Predicated region
    $region6: #{tpu_custom_call.1} parent=1 // pred_check
      _
    $region7: #{tpu_custom_call.1} parent=1 // pred_check_branch
      %24 = sbr.rel (0) target = $region9
    $region8: #{tpu_custom_call.1} parent=1 // pred_region
      %s26 = ssub.s32 1024, 1024
      %27 = vsyncadd [#allocation7], %s26
      %s28 = sshll.u32 [#allocation6], 4
      %s29 = int_to_ptr.vmem [resolvable:$true] %s28
      %34 = dma.hbm_to_vmem [thread:$0]  %s1, 1024, %s29, [#allocation7], 64, 64, 4
    $region9: #{tpu_custom_call.1} parent=1 // pred_fallthru
      _
    // Predicated region
    $region10: #{tpu_custom_call.1} parent=1 // pred_check
      _
    $region11: #{tpu_custom_call.1} parent=1 // pred_check_branch
      %36 = sbr.rel (0) target = $region13
    $region12: #{tpu_custom_call.1} parent=1 // pred_region
      _
    $region13: #{tpu_custom_call.1} parent=1 // pred_fallthru
      _
    // Predicated region
    $region14: #{tpu_custom_call.1} parent=1 // pred_check
      _
    $region15: #{tpu_custom_call.1} parent=1 // pred_check_branch
      %38 = sbr.rel (0) target = $region17
    $region16: #{tpu_custom_call.1} parent=1 // pred_region
      %s40 = ssub.s32 1024, 1024
      %41 = vsyncadd [#allocation7], %s40
      %s42 = sshll.u32 [#allocation8], 4
      %s43 = int_to_ptr.vmem [resolvable:$true] %s42
      %48 = dma.hbm_to_vmem [thread:$0]  %s3, 1024, %s43, [#allocation7], 64, 64, 4
    $region17: #{tpu_custom_call.1} parent=1 // pred_fallthru
      _
    // Predicated region
    $region18: #{tpu_custom_call.1} parent=1 // pred_check
      _
    $region19: #{tpu_custom_call.1} parent=1 // pred_check_branch
      %50 = sbr.rel (0) target = $region21
    $region20: #{tpu_custom_call.1} parent=1 // pred_region
      _
    $region21: #{tpu_custom_call.1} parent=1 // pred_fallthru
      _
    // Predicated region
    $region22: #{tpu_custom_call.1} parent=1 // pred_check
      _
    $region23: #{tpu_custom_call.1} parent=1 // pred_check_branch
      %52 = sbr.rel (0) target = $region25
    $region24: #{tpu_custom_call.1} parent=1 // pred_region
      %53 = dma.done [#allocation4], 64
    $region25: #{tpu_custom_call.1} parent=1 // pred_fallthru
      _
    // Predicated region
    $region26: #{tpu_custom_call.1} parent=1 // pred_check
      _
    $region27: #{tpu_custom_call.1} parent=1 // pred_check_branch
      %55 = sbr.rel (0) target = $region29
    $region28: #{tpu_custom_call.1} parent=1 // pred_region
      %56 = dma.done [#allocation7], 1024
    $region29: #{tpu_custom_call.1} parent=1 // pred_fallthru
      _
    // Predicated region
    $region30: #{tpu_custom_call.1} parent=1 // pred_check
      _
    $region31: #{tpu_custom_call.1} parent=1 // pred_check_branch
      %58 = sbr.rel (0) target = $region33
    $region32: #{tpu_custom_call.1} parent=1 // pred_region
      %59 = dma.done [#allocation7], 1024
    $region33: #{tpu_custom_call.1} parent=1 // pred_fallthru
      _
    %p61 = scmp.eq.s32.totalorder 0, 0
    // Predicated region
    $region34: #{tpu_custom_call.1} parent=1 // pred_check
      %p62 = pneg %p61
    $region35: #{tpu_custom_call.1} parent=1 // pred_check_branch
      %64 = sbr.rel (%p62) target = $region37
    $region36: #{tpu_custom_call.1} parent=1 // pred_region
      %65 = vst [vmem:[#allocation2] sm:$0xff] 0.0
    $region37: #{tpu_custom_call.1} parent=1 // pred_fallthru
      _
    %v66 = vld [vmem:[#allocation3] sm:$0xf]
    %v67 = vld [vmem:[#allocation6] sm:$0xf]
    %v68 = vld [vmem:[#allocation6 + $0x4] sm:$0xf]
    %v69 = vld [vmem:[#allocation6 + $0x8] sm:$0xf]
    %v70 = vld [vmem:[#allocation6 + $0xc] sm:$0xf]
    %v71 = vld [vmem:[#allocation6 + $0x10] sm:$0xf]
    %v72 = vld [vmem:[#allocation6 + $0x14] sm:$0xf]
    %v73 = vld [vmem:[#allocation6 + $0x18] sm:$0xf]
    %v74 = vld [vmem:[#allocation6 + $0x1c] sm:$0xf]
    %v75 = vld [vmem:[#allocation6 + $0x20] sm:$0xf]
    %v76 = vld [vmem:[#allocation6 + $0x24] sm:$0xf]
    %v77 = vld [vmem:[#allocation6 + $0x28] sm:$0xf]
    %v78 = vld [vmem:[#allocation6 + $0x2c] sm:$0xf]
    %v79 = vld [vmem:[#allocation6 + $0x30] sm:$0xf]
    %v80 = vld [vmem:[#allocation6 + $0x34] sm:$0xf]
    %v81 = vld [vmem:[#allocation6 + $0x38] sm:$0xf]
    %v82 = vld [vmem:[#allocation6 + $0x3c] sm:$0xf]
    %s83 = smul.u32 0, 128
    %s84 = sshra.s32 %s83, 7
    %s85 = sand.u32 %s83, 127
    %s86 = scalar_lea.vmem %s2, %s84
    %v87 = vld [vmem:[%s86] sm:$0x1]
    %v89 = vlaneseq
    %v90 = vshrl.u32 %v89, 7
    %v91 = vsub.s32 0, %v90
    %v92 = vrot.slane %v87, %v91
    %v110 = vunpack.c.l.b16 %v67
    %v111 = vunpack.c.l.b16 %v68
    %v112 = vunpack.c.l.b16 %v69
    %v113 = vunpack.c.l.b16 %v70
    %v114 = vunpack.c.l.b16 %v71
    %v115 = vunpack.c.l.b16 %v72
    %v116 = vunpack.c.l.b16 %v73
    %v117 = vunpack.c.l.b16 %v74
    %v118 = vunpack.c.l.b16 %v75
    %v119 = vunpack.c.l.b16 %v76
    %v120 = vunpack.c.l.b16 %v77
    %v121 = vunpack.c.l.b16 %v78
    %v122 = vunpack.c.l.b16 %v79
    %v123 = vunpack.c.l.b16 %v80
    %v124 = vunpack.c.l.b16 %v81
    %v125 = vunpack.c.l.b16 %v82
    %v126 = vpack.c.b16 %v111, %v110
    %v127 = vpack.c.b16 %v113, %v112
    %v128 = vpack.c.b16 %v115, %v114
    %v129 = vpack.c.b16 %v117, %v116
    %v130 = vpack.c.b16 %v119, %v118
    %v131 = vpack.c.b16 %v121, %v120
    %v132 = vpack.c.b16 %v123, %v122
    %v133 = vpack.c.b16 %v125, %v124
    %142 = vmatprep.subr.bf16.mxu0 0
    %143 = vmatpush1.bf16.msra.mxu0 %v126
    %144 = vmatprep.subr.bf16.mxu0 0
    %145 = vmatpush1.bf16.msra.mxu0 %v127
    %146 = vmatprep.subr.bf16.mxu0 0
    %147 = vmatpush1.bf16.msra.mxu0 %v128
    %148 = vmatprep.subr.bf16.mxu0 0
    %149 = vmatpush1.bf16.msra.mxu0 %v129
    %150 = vmatprep.subr.bf16.mxu0 0
    %151 = vmatpush1.bf16.msra.mxu0 %v130
    %152 = vmatprep.subr.bf16.mxu0 0
    %153 = vmatpush1.bf16.msra.mxu0 %v131
    %154 = vmatprep.subr.bf16.mxu0 0
    %155 = vmatpush1.bf16.msra.mxu0 %v132
    %156 = vmatprep.subr.bf16.mxu0 0
    %157 = vmatpush1.bf16.msra.mxu0 %v133
    %158 = vmatprep.subr.bf16.mxu0 0
    %159 = vmatpush1.bf16.msra.mxu0 0
    %160 = vmatprep.subr.bf16.mxu0 0
    %161 = vmatpush1.bf16.msra.mxu0 0
    %162 = vmatprep.subr.bf16.mxu0 0
    %163 = vmatpush1.bf16.msra.mxu0 0
    %164 = vmatprep.subr.bf16.mxu0 0
    %165 = vmatpush1.bf16.msra.mxu0 0
    %166 = vmatprep.subr.bf16.mxu0 0
    %167 = vmatpush1.bf16.msra.mxu0 0
    %168 = vmatprep.subr.bf16.mxu0 0
    %169 = vmatpush1.bf16.msra.mxu0 0
    %170 = vmatprep.subr.bf16.mxu0 0
    %171 = vmatpush1.bf16.msra.mxu0 0
    %172 = vmatprep.subr.bf16.mxu0 0
    %173 = vmatpush1.bf16.msra.mxu0 0
    %174 = vmatprep.mubr.bf16.mxu0 0
    %175 = vmatmul.mubr.bf16.gmra.mrb[0].mxu0 %v66
    %v176 = vpop.f32.mrb[0].mxu0
    %v177 = vadd.f32 %v92, %v176
    %v178 = vpop.f32.mrb[0].mxu0
    %v179 = vpop.f32.mrb[0].mxu0
    %v180 = vpop.f32.mrb[0].mxu0
    %181 = vdwg.mxu0
    %v182 = vxor.u32 %v177, 2147483648
    %v183 = vmul.f32 %v182, 1.442695
    %v184 = vpow.pop %v183
    %v185 = vadd.f32 %v184, 1.0
    %v186 = vrcp.pop %v185
    %v187 = vmul.f32 1.0, %v186
    %v188 = vmul.f32 %v177, %v187
    %v189 = vld [vmem:[#allocation2] sm:$0xff]
    %v190 = vpack.c.bf16 %v188, %v188
    %v191 = vld [vmem:[#allocation8] sm:$0xf]
    %v192 = vld [vmem:[#allocation8 + $0x4] sm:$0xf]
    %v193 = vld [vmem:[#allocation8 + $0x8] sm:$0xf]
    %v194 = vld [vmem:[#allocation8 + $0xc] sm:$0xf]
    %v195 = vld [vmem:[#allocation8 + $0x10] sm:$0xf]
    %v196 = vld [vmem:[#allocation8 + $0x14] sm:$0xf]
    %v197 = vld [vmem:[#allocation8 + $0x18] sm:$0xf]
    %v198 = vld [vmem:[#allocation8 + $0x1c] sm:$0xf]
    %v199 = vld [vmem:[#allocation8 + $0x20] sm:$0xf]
    %v200 = vld [vmem:[#allocation8 + $0x24] sm:$0xf]
    %v201 = vld [vmem:[#allocation8 + $0x28] sm:$0xf]
    %v202 = vld [vmem:[#allocation8 + $0x2c] sm:$0xf]
    %v203 = vld [vmem:[#allocation8 + $0x30] sm:$0xf]
    %v204 = vld [vmem:[#allocation8 + $0x34] sm:$0xf]
    %v205 = vld [vmem:[#allocation8 + $0x38] sm:$0xf]
    %v206 = vld [vmem:[#allocation8 + $0x3c] sm:$0xf]
    %v223 = vunpack.c.l.b16 %v191
    %v224 = vunpack.c.l.b16 %v192
    %v225 = vunpack.c.l.b16 %v193
    %v226 = vunpack.c.l.b16 %v194
    %v227 = vunpack.c.l.b16 %v195
    %v228 = vunpack.c.l.b16 %v196
    %v229 = vunpack.c.l.b16 %v197
    %v230 = vunpack.c.l.b16 %v198
    %v231 = vunpack.c.l.b16 %v199
    %v232 = vunpack.c.l.b16 %v200
    %v233 = vunpack.c.l.b16 %v201
    %v234 = vunpack.c.l.b16 %v202
    %v235 = vunpack.c.l.b16 %v203
    %v236 = vunpack.c.l.b16 %v204
    %v237 = vunpack.c.l.b16 %v205
    %v238 = vunpack.c.l.b16 %v206
    %v239 = vpack.c.b16 %v224, %v223
    %v240 = vpack.c.b16 %v226, %v225
    %v241 = vpack.c.b16 %v228, %v227
    %v242 = vpack.c.b16 %v230, %v229
    %v243 = vpack.c.b16 %v232, %v231
    %v244 = vpack.c.b16 %v234, %v233
    %v245 = vpack.c.b16 %v236, %v235
    %v246 = vpack.c.b16 %v238, %v237
    %255 = vmatprep.subr.bf16.mxu0 0
    %256 = vmatpush1.bf16.msra.mxu0 %v239
    %257 = vmatprep.subr.bf16.mxu0 0
    %258 = vmatpush1.bf16.msra.mxu0 %v240
    %259 = vmatprep.subr.bf16.mxu0 0
    %260 = vmatpush1.bf16.msra.mxu0 %v241
    %261 = vmatprep.subr.bf16.mxu0 0
    %262 = vmatpush1.bf16.msra.mxu0 %v242
    %263 = vmatprep.subr.bf16.mxu0 0
    %264 = vmatpush1.bf16.msra.mxu0 %v243
    %265 = vmatprep.subr.bf16.mxu0 0
    %266 = vmatpush1.bf16.msra.mxu0 %v244
    %267 = vmatprep.subr.bf16.mxu0 0
    %268 = vmatpush1.bf16.msra.mxu0 %v245
    %269 = vmatprep.subr.bf16.mxu0 0
    %270 = vmatpush1.bf16.msra.mxu0 %v246
    %271 = vmatprep.subr.bf16.mxu0 0
    %272 = vmatpush1.bf16.msra.mxu0 0
    %273 = vmatprep.subr.bf16.mxu0 0
    %274 = vmatpush1.bf16.msra.mxu0 0
    %275 = vmatprep.subr.bf16.mxu0 0
    %276 = vmatpush1.bf16.msra.mxu0 0
    %277 = vmatprep.subr.bf16.mxu0 0
    %278 = vmatpush1.bf16.msra.mxu0 0
    %279 = vmatprep.subr.bf16.mxu0 0
    %280 = vmatpush1.bf16.msra.mxu0 0
    %281 = vmatprep.subr.bf16.mxu0 0
    %282 = vmatpush1.bf16.msra.mxu0 0
    %283 = vmatprep.subr.bf16.mxu0 0
    %284 = vmatpush1.bf16.msra.mxu0 0
    %285 = vmatprep.subr.bf16.mxu0 0
    %286 = vmatpush1.bf16.msra.mxu0 0
    %287 = vmatprep.mubr.bf16.mxu0 0
    %288 = vmatmul.mubr.bf16.gmra.mrb[0].mxu0 %v190
    %v289 = vpop.f32.mrb[0].mxu0
    %v290 = vadd.f32 0.0, %v289
    %v291 = vpop.f32.mrb[0].mxu0
    %v292 = vpop.f32.mrb[0].mxu0
    %v293 = vpop.f32.mrb[0].mxu0
    %294 = vdwg.mxu0
    %v295 = vadd.f32 %v189, %v290
    %296 = vst [vmem:[#allocation2] sm:$0xff] %v295
    // Predicated region
    $region38: #{tpu_custom_call.1} parent=1 // pred_check
      %p297 = pneg %p61
    $region39: #{tpu_custom_call.1} parent=1 // pred_check_branch
      %299 = sbr.rel (%p297) target = $region41
    $region40: #{tpu_custom_call.1} parent=1 // pred_region
      %v300 = vld [vmem:[#allocation2] sm:$0xff]
      %v301 = vld [vmem:[%s4] sm:$0x1]
      %v303 = vlaneseq
      %v304 = vshrl.u32 %v303, 7
      %v305 = vsub.s32 0, %v304
      %v306 = vrot.slane %v301, %v305
      %v308 = vadd.f32 %v300, %v306
      %309 = vst [vmem:[#allocation9] sm:$0xff] %v308
    $region41: #{tpu_custom_call.1} parent=1 // pred_fallthru
      _
    // Predicated region
    $region42: #{tpu_custom_call.1} parent=1 // pred_check
      _
    $region43: #{tpu_custom_call.1} parent=1 // pred_check_branch
      %311 = sbr.rel (0) target = $region45
    $region44: #{tpu_custom_call.1} parent=1 // pred_region
      %s313 = ssub.s32 128, 128
      %314 = vsyncadd [#allocation5], %s313
      %s316 = sshll.u32 [#allocation9], 4
      %s317 = int_to_ptr.vmem [resolvable:$true] %s316
      %319 = dma.vmem_to_hbm [thread:$0]  %s317, 128, %s5, [#allocation5]
    $region45: #{tpu_custom_call.1} parent=1 // pred_fallthru
      _
    // Predicated region
    $region46: #{tpu_custom_call.1} parent=1 // pred_check
      _
    $region47: #{tpu_custom_call.1} parent=1 // pred_check_branch
      %321 = sbr.rel (0) target = $region49
    $region48: #{tpu_custom_call.1} parent=1 // pred_region
      %322 = dma.done [#allocation5], 128
    $region49: #{tpu_custom_call.1} parent=1 // pred_fallthru
      _
    %323 = vsyncpa [#allocation4], 1
    %324 = vsyncpa [#allocation7], 1
    %325 = vsyncpa [#allocation5], 1

</llo_original>
